<compile_context>
chip_gen: v7x
topology: tpu7x:2x2x1
jax: 0.10.0
libtpu: 0.0.40
codegen_flags: <defaults>
</compile_context>

<pallas_src>
import functools

import jax
import jax.numpy as jnp
from jax.experimental import pallas as pl
from jax.experimental.pallas import tpu as pltpu


def _two_class_logp(x_ref, w0_ref, w1_ref, b_ref):
    """Linear(4,2) + 2-class log-softmax on a (D, TN) lane-dense tile."""
    x = x_ref[...].astype(jnp.float32)            # (4, TN), batch on lanes
    w0 = w0_ref[...].astype(jnp.float32)          # (4, 1)
    w1 = w1_ref[...].astype(jnp.float32)          # (4, 1)
    b = b_ref[...].astype(jnp.float32)            # (1, 2)

    # Linear layer without the MXU: lane-broadcast weight column, then a
    # 4-sublane reduce (stays inside each vreg column, no MXU relayout).
    z0 = jnp.sum(x * w0, axis=0, keepdims=True) + b[:, 0:1]   # (1, TN)
    z1 = jnp.sum(x * w1, axis=0, keepdims=True) + b[:, 1:2]   # (1, TN)

    # Two-class log-softmax from a single stable softplus:
    #   d = z1 - z0 ; sp = softplus(d) = max(d, 0) + log(1 + exp(-|d|))
    #   logp0 = -sp ; logp1 = d - sp
    d = z1 - z0
    sp = jnp.maximum(d, 0.0) + jnp.log(1.0 + jnp.exp(-jnp.abs(d)))
    return -sp, d - sp


def _infer_kernel(x_ref, w0_ref, w1_ref, b_ref, logp_ref):
    """Inference path: no target, no loss work."""
    logp0, logp1 = _two_class_logp(x_ref, w0_ref, w1_ref, b_ref)
    logp_ref[0:1, :] = logp0
    logp_ref[1:2, :] = logp1


def _train_kernel(x_ref, w0_ref, w1_ref, b_ref, tgt_ref, logp_ref, part_ref,
                  *, n_rows, tile_n, ragged):
    """One batch tile: logp rows + per-tile partial NLL sum (no cross-step state)."""
    i = pl.program_id(0)

    logp0, logp1 = _two_class_logp(x_ref, w0_ref, w1_ref, b_ref)
    logp_ref[0:1, :] = logp0
    logp_ref[1:2, :] = logp1

    # Per-sample NLL pick without one-hot / iota (C == 2).
    picked = jnp.where(tgt_ref[...] == 0, logp0, logp1)       # (1, TN)

    # Partial sum written to lane 0 of this step's (1, 128) output block; the
    # remaining lanes are zero so the wrapper can simply sum the whole array.
    lane = jax.lax.broadcasted_iota(jnp.int32, (1, 128), 1)

    def write_partial(s):
        part_ref[...] = jnp.where(lane == 0, s, 0.0)

    if not ragged:
        # N % TN == 0: every tile is full, no masking code at all.
        write_partial(jnp.sum(picked))
    else:
        last = pl.num_programs(0) - 1

        @pl.when(i != last)
        def _():
            write_partial(jnp.sum(picked))

        @pl.when(i == last)
        def _():
            # Mask columns past the true batch size; where() keeps NaN/Inf
            # from garbage padded columns out of the sum.
            col = jax.lax.broadcasted_iota(jnp.int32, (1, tile_n), 1)
            valid = (i * tile_n + col) < n_rows
            write_partial(jnp.sum(jnp.where(valid, picked, 0.0)))


def _pick_tile(n, target):
    """Batch-tile size: full N if it fits in one block, else a multiple of 128."""
    if n <= target:
        return n
    return max((target // 128) * 128, 128)


def _vmem_limit_bytes(tile_n):
    # Double-buffered, 8-sublane-padded x / logp / tgt block buffers plus
    # headroom for compiler temporaries; clamped so the request stays valid on
    # every generation (v7x has only 64 MiB physical VMEM per TensorCore).
    block = 8 * tile_n * 4                 # one (<=8, TN) fp32/int32 buffer
    est = 2 * (6 * block) + (8 << 20)      # x, logp, tgt double-buffered + slack
    return int(min(max(est, 16 << 20), 48 << 20))


def model_forward(inputs, weight, bias, outputs_tgt=None, *, tile_n=32768):
    """Mirrors Model.forward: returns {'losses': {...}, 'preds': {...}}."""
    N, D = inputs.shape
    C, Dw = weight.shape
    assert D == 4 and C == 2 and Dw == D, "kernel is specialised for Linear(4, 2)"

    TN = _pick_tile(N, tile_n)
    G = pl.cdiv(N, TN)
    grid = (G,)

    # Layout plumbing (one XLA pass each, outside the per-step kernel loop):
    x_t = jnp.transpose(inputs)            # (D, N): batch on the 128-wide lanes
    w0 = weight[0].reshape(D, 1)
    w1 = weight[1].reshape(D, 1)
    b2 = bias.reshape(1, C)

    x_spec = pl.BlockSpec((D, TN), lambda i: (0, i))
    w_spec = pl.BlockSpec((D, 1), lambda i: (0, 0))
    b_spec = pl.BlockSpec((1, C), lambda i: (0, 0))
    logp_spec = pl.BlockSpec((C, TN), lambda i: (0, i))

    params = pltpu.CompilerParams(
        dimension_semantics=("parallel",),          # both v7x TCs share the grid
        vmem_limit_bytes=_vmem_limit_bytes(TN))

    if outputs_tgt is None:
        logp_t = pl.pallas_call(
            _infer_kernel,
            out_shape=jax.ShapeDtypeStruct((C, N), jnp.float32),
            grid=grid,
            in_specs=[x_spec, w_spec, w_spec, b_spec],
            out_specs=logp_spec,
            compiler_params=params,
        )(x_t, w0, w1, b2)
        return {"losses": {}, "preds": {"outputs": jnp.transpose(logp_t)}}

    tgt = outputs_tgt.astype(jnp.int32).reshape(1, N)   # lane-dense target row
    tgt_spec = pl.BlockSpec((1, TN), lambda i: (0, i))
    part_spec = pl.BlockSpec((1, 128), lambda i: (0, i))

    kernel = functools.partial(_train_kernel, n_rows=N, tile_n=TN,
                               ragged=(N % TN != 0))
    logp_t, partials = pl.pallas_call(
        kernel,
        out_shape=(
            jax.ShapeDtypeStruct((C, N), jnp.float32),
            jax.ShapeDtypeStruct((1, G * 128), jnp.float32),   # per-tile NLL sums
        ),
        grid=grid,
        in_specs=[x_spec, w_spec, w_spec, b_spec, tgt_spec],
        out_specs=(logp_spec, part_spec),
        compiler_params=params,
    )(x_t, w0, w1, b2, tgt)

    loss = -(jnp.sum(partials) / jnp.float32(N))
    return {
        "losses": {"outputs": loss},
        "preds": {"outputs": jnp.transpose(logp_t)},
    }


if __name__ == "__main__":
    key = jax.random.PRNGKey(0)
    k_x, k_w, k_b, k_t = jax.random.split(key, 4)

    D, C = 4, 2
    # Deterministic "Linear(4, 2)" params (synthetic init, PyTorch-shaped).
    weight = jax.random.uniform(k_w, (C, D), minval=-0.5, maxval=0.5,
                                dtype=jnp.float32)
    bias = jax.random.uniform(k_b, (C,), minval=-0.5, maxval=0.5,
                              dtype=jnp.float32)

    def reference(x, tgt=None):
        logits = x @ weight.T + bias
        logp = logits - jax.scipy.special.logsumexp(logits, axis=-1,
                                                    keepdims=True)
        if tgt is None:
            return logp, None
        loss = -jnp.mean(jnp.take_along_axis(logp, tgt[:, None], axis=1))
        return logp, loss

    # Case 1: small batch, single block (TN == N), training path.
    N1 = 8
    x1 = jax.random.normal(k_x, (N1, D), dtype=jnp.float32)
    t1 = jax.random.randint(k_t, (N1,), 0, C, dtype=jnp.int32)
    out1 = model_forward(x1, weight, bias, outputs_tgt=t1)
    jax.block_until_ready(out1)
    lp1, ls1 = reference(x1, t1)
    assert jnp.allclose(out1["preds"]["outputs"], lp1, atol=1e-5)
    assert jnp.allclose(out1["losses"]["outputs"], ls1, atol=1e-5)

    # Case 2: multi-tile grid with a ragged last tile (N=300, TN=128 -> 3 steps).
    N2 = 300
    k_x2, k_t2 = jax.random.split(k_x)
    x2 = jax.random.normal(k_x2, (N2, D), dtype=jnp.float32)
    t2 = jax.random.randint(k_t2, (N2,), 0, C, dtype=jnp.int32)
    out2 = model_forward(x2, weight, bias, outputs_tgt=t2, tile_n=128)
    jax.block_until_ready(out2)
    lp2, ls2 = reference(x2, t2)
    assert jnp.allclose(out2["preds"]["outputs"], lp2, atol=1e-5)
    assert jnp.allclose(out2["losses"]["outputs"], ls2, atol=1e-5)

    # Case 3: multi-tile, exact division (no ragged-masking code in the kernel).
    N3 = 512
    k_x3, k_t3 = jax.random.split(k_x2)
    x3 = jax.random.normal(k_x3, (N3, D), dtype=jnp.float32)
    t3 = jax.random.randint(k_t3, (N3,), 0, C, dtype=jnp.int32)
    out3 = model_forward(x3, weight, bias, outputs_tgt=t3, tile_n=128)
    jax.block_until_ready(out3)
    lp3, ls3 = reference(x3, t3)
    assert jnp.allclose(out3["preds"]["outputs"], lp3, atol=1e-5)
    assert jnp.allclose(out3["losses"]["outputs"], ls3, atol=1e-5)

    # Case 4: inference path (no target) -> loss-free kernel, empty losses dict.
    out4 = model_forward(x2, weight, bias, outputs_tgt=None, tile_n=128)
    jax.block_until_ready(out4)
    assert jnp.allclose(out4["preds"]["outputs"], lp2, atol=1e-5)
    assert out4["losses"] == {}

    print("KERNEL_OK")
</pallas_src>

<mosaic_0001>
module attributes {stable_mosaic.version = 11 : i64} {
  func.func @_train_kernel(%arg0: i32, %arg1: memref<4x8xf32, #tpu.memory_space<vmem>>, %arg2: memref<4x1xf32, #tpu.memory_space<vmem>>, %arg3: memref<4x1xf32, #tpu.memory_space<vmem>>, %arg4: memref<1x2xf32, #tpu.memory_space<vmem>>, %arg5: memref<1x8xi32, #tpu.memory_space<vmem>>, %arg6: memref<2x8xf32, #tpu.memory_space<vmem>>, %arg7: memref<1x128xf32, #tpu.memory_space<vmem>>) attributes {dimension_semantics = [#tpu.dimension_semantics<parallel>], iteration_bounds = array<i64: 1>, scalar_prefetch = 0 : i64, scratch_operands = 0 : i64, tpu.core_type = #tpu.core_type<tc>, window_params = [{transform_indices = @transform_0, window_bounds = array<i64: 4, 8>}, {pipeline_mode = #tpu.pipeline_mode<synchronous>, transform_indices = @transform_1, window_bounds = array<i64: 4, 1>}, {pipeline_mode = #tpu.pipeline_mode<synchronous>, transform_indices = @transform_2, window_bounds = array<i64: 4, 1>}, {pipeline_mode = #tpu.pipeline_mode<synchronous>, transform_indices = @transform_3, window_bounds = array<i64: 1, 2>}, {transform_indices = @transform_4, window_bounds = array<i64: 1, 8>}, {transform_indices = @transform_5, window_bounds = array<i64: 2, 8>}, {transform_indices = @transform_6, window_bounds = array<i64: 1, 128>}]} {
    %c0 = arith.constant 0 : index
    %c0_0 = arith.constant 0 : index
    %0 = vector.load %arg1[%c0, %c0_0] : memref<4x8xf32, #tpu.memory_space<vmem>>, vector<4x8xf32>
    %c0_1 = arith.constant 0 : index
    %c0_2 = arith.constant 0 : index
    %1 = vector.load %arg2[%c0_1, %c0_2] : memref<4x1xf32, #tpu.memory_space<vmem>>, vector<4x1xf32>
    %c0_3 = arith.constant 0 : index
    %c0_4 = arith.constant 0 : index
    %2 = vector.load %arg3[%c0_3, %c0_4] : memref<4x1xf32, #tpu.memory_space<vmem>>, vector<4x1xf32>
    %c0_5 = arith.constant 0 : index
    %c0_6 = arith.constant 0 : index
    %3 = vector.load %arg4[%c0_5, %c0_6] : memref<1x2xf32, #tpu.memory_space<vmem>>, vector<1x2xf32>
    %4 = vector.broadcast %1 : vector<4x1xf32> to vector<4x8xf32>
    %5 = arith.mulf %0, %4 : vector<4x8xf32>
    %cst = arith.constant dense<0.000000e+00> : vector<8xf32>
    %6 = vector.multi_reduction <add>, %5, %cst [0] : vector<4x8xf32> to vector<8xf32>
    %7 = vector.shape_cast %6 : vector<8xf32> to vector<1x8xf32>
    %8 = vector.extract_strided_slice %3 {offsets = [0, 0], sizes = [1, 1], strides = [1, 1]} : vector<1x2xf32> to vector<1x1xf32>
    %9 = vector.broadcast %8 : vector<1x1xf32> to vector<1x8xf32>
    %10 = arith.addf %7, %9 : vector<1x8xf32>
    %11 = vector.broadcast %2 : vector<4x1xf32> to vector<4x8xf32>
    %12 = arith.mulf %0, %11 : vector<4x8xf32>
    %cst_7 = arith.constant dense<0.000000e+00> : vector<8xf32>
    %13 = vector.multi_reduction <add>, %12, %cst_7 [0] : vector<4x8xf32> to vector<8xf32>
    %14 = vector.shape_cast %13 : vector<8xf32> to vector<1x8xf32>
    %15 = vector.extract_strided_slice %3 {offsets = [0, 1], sizes = [1, 1], strides = [1, 1]} : vector<1x2xf32> to vector<1x1xf32>
    %16 = vector.broadcast %15 : vector<1x1xf32> to vector<1x8xf32>
    %17 = arith.addf %14, %16 : vector<1x8xf32>
    %18 = arith.subf %17, %10 : vector<1x8xf32>
    %cst_8 = arith.constant 0.000000e+00 : f32
    %19 = vector.broadcast %cst_8 : f32 to vector<1x8xf32>
    %20 = arith.maximumf %18, %19 : vector<1x8xf32>
    %21 = math.absf %18 : vector<1x8xf32>
    %cst_9 = arith.constant 0.000000e+00 : f32
    %22 = vector.broadcast %cst_9 : f32 to vector<1x8xf32>
    %23 = arith.subf %22, %21 : vector<1x8xf32>
    %24 = math.exp %23 : vector<1x8xf32>
    %cst_10 = arith.constant 1.000000e+00 : f32
    %25 = vector.broadcast %cst_10 : f32 to vector<1x8xf32>
    %26 = arith.addf %25, %24 : vector<1x8xf32>
    %27 = math.log %26 : vector<1x8xf32>
    %28 = arith.addf %20, %27 : vector<1x8xf32>
    %cst_11 = arith.constant 0.000000e+00 : f32
    %29 = vector.broadcast %cst_11 : f32 to vector<1x8xf32>
    %30 = arith.subf %29, %28 : vector<1x8xf32>
    %31 = arith.subf %18, %28 : vector<1x8xf32>
    %c0_12 = arith.constant 0 : index
    %c0_13 = arith.constant 0 : index
    %32 = vector.load %arg6[%c0_12, %c0_13] : memref<2x8xf32, #tpu.memory_space<vmem>>, vector<1x8xf32>
    tpu.vector_store %arg6[%c0_12, %c0_13], %30 {strides = array<i32>} : memref<2x8xf32, #tpu.memory_space<vmem>>, vector<1x8xf32>,
    %c1 = arith.constant 1 : index
    %c0_14 = arith.constant 0 : index
    %33 = vector.load %arg6[%c1, %c0_14] : memref<2x8xf32, #tpu.memory_space<vmem>>, vector<1x8xf32>
    tpu.vector_store %arg6[%c1, %c0_14], %31 {strides = array<i32>} : memref<2x8xf32, #tpu.memory_space<vmem>>, vector<1x8xf32>,
    %c0_15 = arith.constant 0 : index
    %c0_16 = arith.constant 0 : index
    %34 = vector.load %arg5[%c0_15, %c0_16] : memref<1x8xi32, #tpu.memory_space<vmem>>, vector<1x8xi32>
    %c0_i32 = arith.constant 0 : i32
    %35 = vector.broadcast %c0_i32 : i32 to vector<1x8xi32>
    %36 = arith.cmpi eq, %34, %35 : vector<1x8xi32>
    %37 = arith.select %36, %30, %31 : vector<1x8xi1>, vector<1x8xf32>
    %38 = tpu.iota {dimensions = array<i32: 1>} : vector<1x128xi32>
    %39 = vector.shape_cast %37 : vector<1x8xf32> to vector<1x1x8xf32>
    %cst_17 = arith.constant dense<0.000000e+00> : vector<1xf32>
    %40 = vector.multi_reduction <add>, %39, %cst_17 [1, 2] : vector<1x1x8xf32> to vector<1xf32>
    %41 = vector.shape_cast %40 : vector<1xf32> to vector<1x1x1xf32>
    %42 = vector.extract %41[0, 0, 0] : f32 from vector<1x1x1xf32>
    %c0_i32_18 = arith.constant 0 : i32
    %43 = vector.broadcast %c0_i32_18 : i32 to vector<1x128xi32>
    %44 = arith.cmpi eq, %38, %43 : vector<1x128xi32>
    %cst_19 = arith.constant 0.000000e+00 : f32
    %45 = vector.broadcast %42 : f32 to vector<1x128xf32>
    %46 = vector.broadcast %cst_19 : f32 to vector<1x128xf32>
    %47 = arith.select %44, %45, %46 : vector<1x128xi1>, vector<1x128xf32>
    %c0_20 = arith.constant 0 : index
    %c0_21 = arith.constant 0 : index
    %48 = vector.load %arg7[%c0_20, %c0_21] : memref<1x128xf32, #tpu.memory_space<vmem>>, vector<1x128xf32>
    tpu.vector_store %arg7[%c0_20, %c0_21], %47 {strides = array<i32>} : memref<1x128xf32, #tpu.memory_space<vmem>>, vector<1x128xf32>,
    return
  }
  func.func @transform_0(%arg0: i32) -> (i32, i32) {
    %c0_i32 = arith.constant 0 : i32
    %c0_i32_0 = arith.constant 0 : i32
    return %c0_i32, %arg0 : i32, i32
  }
  func.func @transform_1(%arg0: i32) -> (i32, i32) {
    %c0_i32 = arith.constant 0 : i32
    %c0_i32_0 = arith.constant 0 : i32
    %c0_i32_1 = arith.constant 0 : i32
    return %c0_i32, %c0_i32_0 : i32, i32
  }
  func.func @transform_2(%arg0: i32) -> (i32, i32) {
    %c0_i32 = arith.constant 0 : i32
    %c0_i32_0 = arith.constant 0 : i32
    %c0_i32_1 = arith.constant 0 : i32
    return %c0_i32, %c0_i32_0 : i32, i32
  }
  func.func @transform_3(%arg0: i32) -> (i32, i32) {
    %c0_i32 = arith.constant 0 : i32
    %c0_i32_0 = arith.constant 0 : i32
    %c0_i32_1 = arith.constant 0 : i32
    return %c0_i32, %c0_i32_0 : i32, i32
  }
  func.func @transform_4(%arg0: i32) -> (i32, i32) {
    %c0_i32 = arith.constant 0 : i32
    %c0_i32_0 = arith.constant 0 : i32
    return %c0_i32, %arg0 : i32, i32
  }
  func.func @transform_5(%arg0: i32) -> (i32, i32) {
    %c0_i32 = arith.constant 0 : i32
    %c0_i32_0 = arith.constant 0 : i32
    return %c0_i32, %arg0 : i32, i32
  }
  func.func @transform_6(%arg0: i32) -> (i32, i32) {
    %c0_i32 = arith.constant 0 : i32
    %c0_i32_0 = arith.constant 0 : i32
    return %c0_i32, %arg0 : i32, i32
  }
}

</mosaic_0001>

<llo_original>
// kernel: tpu_custom_call.1
$region0: #{tpu_custom_call.1}
  #allocation0 [shape = 'u32[]', space=smem, size = 0x4, offset = 0x4, fixed_abs, tag = 'smem constant byte address 0x4 - core index']
  #allocation1 [shape = 'u32[144,128]{1,0:T(1,128)}', space=vmem, size = 0x12000, scoped, tag = 'internal scratch']
  %s0 = inlined_call_operand.vmem [shape: f32[4,8], index: 0, kind: input, shape index: {}]
  %s1 = inlined_call_operand.vmem [shape: f32[4,1], index: 1, kind: input, shape index: {}]
  %s2 = inlined_call_operand.vmem [shape: f32[4,1], index: 2, kind: input, shape index: {}]
  %s3 = inlined_call_operand.vmem [shape: f32[1,2], index: 3, kind: input, shape index: {}]
  %s4 = inlined_call_operand.vmem [shape: s32[1,8], index: 4, kind: input, shape index: {}]
  %s5 = inlined_call_operand.hbm [shape: f32[2,8], index: 5, kind: output, shape index: {0}]
  %s6 = inlined_call_operand.hbm [shape: f32[1,128], index: 6, kind: output, shape index: {1}]
  %7 = xla_tuple %s5, %s6
  %s8 = sld [smem:[#allocation0]]
  $region38: #{tpu_custom_call.1} parent=0
    _
  %s10 = ssub.s32 1, %s8
  %s11 = scalar_select 0, %s10, %s8
  $region1: #{tpu_custom_call.1} parent=0
    #allocation2 [shape = 'u8[1024]{0}', space=vmem, size = 0x400, scoped, tag = 'output window, operand 0, single buffered']
    #allocation3 [shape = 's32[1]{0}', space=sflag, size = 0x4, scoped, tag = 'scoped memory for tpu_custom_call.1']
    #allocation4 [shape = 'u8[512]{0}', space=vmem, size = 0x400, scoped, tag = 'output window, operand 1, single buffered']
    #allocation5 [shape = 's32[1]{0}', space=sflag, size = 0x4, scoped, tag = 'scoped memory for tpu_custom_call.1']
    %12 = vsyncpa [#allocation3], 0
    %13 = vsyncpa [#allocation5], 0
    // Predicated region
    $region2: #{tpu_custom_call.1} parent=1 // pred_check
      _
    $region3: #{tpu_custom_call.1} parent=1 // pred_check_branch
      %15 = sbr.rel (0) target = $region5
    $region4: #{tpu_custom_call.1} parent=1 // pred_region
      _
    $region5: #{tpu_custom_call.1} parent=1 // pred_fallthru
      _
    // Predicated region
    $region6: #{tpu_custom_call.1} parent=1 // pred_check
      _
    $region7: #{tpu_custom_call.1} parent=1 // pred_check_branch
      %17 = sbr.rel (0) target = $region9
    $region8: #{tpu_custom_call.1} parent=1 // pred_region
      _
    $region9: #{tpu_custom_call.1} parent=1 // pred_fallthru
      _
    // Predicated region
    $region10: #{tpu_custom_call.1} parent=1 // pred_check
      _
    $region11: #{tpu_custom_call.1} parent=1 // pred_check_branch
      %19 = sbr.rel (0) target = $region13
    $region12: #{tpu_custom_call.1} parent=1 // pred_region
      _
    $region13: #{tpu_custom_call.1} parent=1 // pred_fallthru
      _
    // Predicated region
    $region14: #{tpu_custom_call.1} parent=1 // pred_check
      _
    $region15: #{tpu_custom_call.1} parent=1 // pred_check_branch
      %21 = sbr.rel (0) target = $region17
    $region16: #{tpu_custom_call.1} parent=1 // pred_region
      _
    $region17: #{tpu_custom_call.1} parent=1 // pred_fallthru
      _
    // Predicated region
    $region18: #{tpu_custom_call.1} parent=1 // pred_check
      _
    $region19: #{tpu_custom_call.1} parent=1 // pred_check_branch
      %23 = sbr.rel (0) target = $region21
    $region20: #{tpu_custom_call.1} parent=1 // pred_region
      _
    $region21: #{tpu_custom_call.1} parent=1 // pred_fallthru
      _
    %v24 = vld [vmem:[%s0] sm:$0xf]
    %v25 = vld [vmem:[%s1] sm:$0xf]
    %v26 = vld [vmem:[%s2] sm:$0xf]
    %v27 = vld [vmem:[%s3] sm:$0x1]
    %29 = vset.pattern.permute.xlu0 0
    %30 = vperm.xlu0 %29, %v25
    %v31 = vpop.permute.xlu0 %30
    %v33 = vmul.f32 %v24, %v31
    %vm34 = vcmask 60416
    %v35 = vsel %vm34, %v33, 0.0
    %v36 = vrot.slane %v35, 4
    %v37 = vadd.f32 %v35, %v36
    %v38 = vrot.slane %v37, 2
    %v39 = vadd.f32 %v37, %v38
    %v40 = vrot.slane %v39, 1
    %v41 = vadd.f32 %v39, %v40
    %43 = vset.pattern.permute.xlu0 0
    %44 = vperm.xlu0 %43, %v27
    %v45 = vpop.permute.xlu0 %44
    %v47 = vlaneseq
    %v48 = vshrl.u32 %v47, 7
    %v49 = vsub.s32 0, %v48
    %v50 = vrot.slane %v45, %v49
    %v51 = vadd.f32 %v41, %v50
    %53 = vset.pattern.permute.xlu0 0
    %54 = vperm.xlu0 %53, %v26
    %v55 = vpop.permute.xlu0 %54
    %v57 = vmul.f32 %v24, %v55
    %v58 = vsel %vm34, %v57, 0.0
    %v59 = vrot.slane %v58, 4
    %v60 = vadd.f32 %v58, %v59
    %v61 = vrot.slane %v60, 2
    %v62 = vadd.f32 %v60, %v61
    %v63 = vrot.slane %v62, 1
    %v64 = vadd.f32 %v62, %v63
    %65 = vset.pattern.permute.xlu0 1
    %66 = vperm.xlu0 %65, %v27
    %v67 = vpop.permute.xlu0 %66
    %v69 = vlaneseq
    %v70 = vshrl.u32 %v69, 7
    %v71 = vsub.s32 0, %v70
    %v72 = vrot.slane %v67, %v71
    %v73 = vadd.f32 %v64, %v72
    %v74 = vsub.f32 %v73, %v51
    %v75 = vmax.f32 %v74, 0.0
    %v76 = vand.u32 2147483647, %v74
    %v77 = vsub.f32 0.0, %v76
    %v78 = vmul.f32 %v77, 1.442695
    %v79 = vpow.pop %v78
    %v80 = vadd.f32 %v79, 1.0
    %v81 = vlog2.pop %v80
    %v82 = vmul.f32 %v81, 0.6931472
    %v83 = vadd.f32 %v75, %v82
    %v84 = vsub.f32 0.0, %v83
    %v85 = vsub.f32 %v74, %v83
    %vm86 = vcmask 57344
    %87 = vst.msk [vmem:[#allocation2] sm:$0x1] %vm86, %v84
    %88 = vst.msk [vmem:[#allocation2 + $0x1] sm:$0x1] %vm86, %v85
    %v89 = vld [vmem:[%s4] sm:$0x1]
    %vm90 = vcmp.eq.s32.totalorder %v89, 0
    %v91 = vsel %vm90, %v84, %v85
    %v92 = vlaneseq
    %v93 = vand.u32 %v92, 127
    %v94 = vsel %vm86, %v91, 0.0
    %95 = vadd.xlane.f32.xlu0 %v94
    %v96 = vpop.xlane.xlu0 %95
    %v97 = vrot.slane %v96, 4
    %v98 = vadd.f32 %v96, %v97
    %v99 = vrot.slane %v98, 2
    %v100 = vadd.f32 %v98, %v99
    %v101 = vrot.slane %v100, 1
    %v102 = vadd.f32 %v100, %v101
    %s103 = vtos %v102
    %vm104 = vcmp.eq.s32.totalorder %v93, 0
    %v105 = vstv %s103
    %v106 = vsel %vm104, %v105, 0.0
    %107 = vst [vmem:[#allocation4] sm:$0x1] %v106
    // Predicated region
    $region22: #{tpu_custom_call.1} parent=1 // pred_check
      _
    $region23: #{tpu_custom_call.1} parent=1 // pred_check_branch
      %109 = sbr.rel (0) target = $region25
    $region24: #{tpu_custom_call.1} parent=1 // pred_region
      %s111 = ssub.s32 32, 32
      %112 = vsyncadd [#allocation3], %s111
      %s114 = sshll.u32 [#allocation2], 4
      %s115 = int_to_ptr.vmem [resolvable:$true] %s114
      %117 = dma.vmem_to_hbm [thread:$0]  %s115, 32, %s5, [#allocation3]
    $region25: #{tpu_custom_call.1} parent=1 // pred_fallthru
      _
    // Predicated region
    $region26: #{tpu_custom_call.1} parent=1 // pred_check
      _
    $region27: #{tpu_custom_call.1} parent=1 // pred_check_branch
      %119 = sbr.rel (0) target = $region29
    $region28: #{tpu_custom_call.1} parent=1 // pred_region
      %s121 = ssub.s32 16, 16
      %122 = vsyncadd [#allocation5], %s121
      %s124 = sshll.u32 [#allocation4], 4
      %s125 = int_to_ptr.vmem [resolvable:$true] %s124
      %127 = dma.vmem_to_hbm [thread:$0]  %s125, 16, %s6, [#allocation5]
    $region29: #{tpu_custom_call.1} parent=1 // pred_fallthru
      _
    // Predicated region
    $region30: #{tpu_custom_call.1} parent=1 // pred_check
      _
    $region31: #{tpu_custom_call.1} parent=1 // pred_check_branch
      %129 = sbr.rel (0) target = $region33
    $region32: #{tpu_custom_call.1} parent=1 // pred_region
      %130 = dma.done [#allocation3], 32
    $region33: #{tpu_custom_call.1} parent=1 // pred_fallthru
      _
    // Predicated region
    $region34: #{tpu_custom_call.1} parent=1 // pred_check
      _
    $region35: #{tpu_custom_call.1} parent=1 // pred_check_branch
      %132 = sbr.rel (0) target = $region37
    $region36: #{tpu_custom_call.1} parent=1 // pred_region
      %133 = dma.done [#allocation5], 16
    $region37: #{tpu_custom_call.1} parent=1 // pred_fallthru
      _
    %134 = vsyncpa [#allocation3], 1
    %135 = vsyncpa [#allocation5], 1

</llo_original>
